<compile_context>
chip_gen: v7x
topology: tpu7x:2x2x1
jax: 0.10.0
libtpu: 0.0.40
codegen_flags: <defaults>
</compile_context>

<pallas_src>
import functools

import jax
import jax.numpy as jnp
from jax.experimental import pallas as pl
from jax.experimental.pallas import tpu as pltpu

_SUBLANE = 8
_LANE = 128
_GRAIN = _SUBLANE * _LANE    # 1024: batch grain keeps every (8, bt/8) tile (8,128)-aligned


def _mlp_scaling_kernel(p_ref, x_ref, o_ref, *, dims, sigmoid_max, use_sigmoid,
                        approx_recip):
    """Forward pass for one sublane+lane dense batch tile (fully in VMEM).

    p_ref : SMEM f32[P]   packed [w1 (out,in) row-major, b1, w2, b2, ..., wN, bN]
    x_ref : VMEM (in_dim, 8, bt/8)  input dtype, batch on sublanes AND lanes
    o_ref : VMEM (8, bt/8)          output dtype
    """
    in_dim = dims[0]
    n_layers = len(dims) - 1

    # Activations: python list of (8, bt/8) f32 arrays, one per feature.
    # Every MAC below is a fully dense vreg op; weight/bias scalars are read
    # from SMEM and splat once per tile.
    z = [x_ref[k].astype(jnp.float32) for k in range(in_dim)]

    off = 0
    for li in range(n_layers):
        n_in, n_out = dims[li], dims[li + 1]
        w_off, b_off = off, off + n_out * n_in
        outs = []
        for o in range(n_out):
            acc = p_ref[w_off + o * n_in] * z[0]
            for k in range(1, n_in):
                acc = acc + p_ref[w_off + o * n_in + k] * z[k]
            acc = acc + p_ref[b_off + o]
            if li < n_layers - 1:
                acc = jnp.maximum(acc, 0.0)          # ReLU hidden activation
            outs.append(acc)
        z = outs
        off = b_off + n_out

    y = z[0]                                         # head out_dim == 1
    if use_sigmoid:
        # sigmoid(y) * sigmoid_max, with exp on the EUP and the reciprocal on
        # the EUP (approx) instead of a VALU divide.
        y = pl.reciprocal(1.0 + jnp.exp(-y), approx=approx_recip) * sigmoid_max
    else:
        y = jax.nn.softplus(y)

    o_ref[...] = y.astype(o_ref.dtype)


def scaling_forward(x, params, *, sigmoid_max=1.0, use_sigmoid=True,
                    batch_tile=32768, approx_recip=True):
    """x: [B, in_dim] (kept in its own dtype).  params in torch nn.Linear
    layout: w{i}: (out_i, in_i), b{i}: (out_i,)."""
    B, in_dim = x.shape
    n_layers = len(params) // 2

    # ---- pack all weights/biases into one tiny flat f32 array (SMEM) --------
    dims = [in_dim]
    flat = []
    for li in range(n_layers):
        w = params[f"w{li + 1}"].astype(jnp.float32)
        b = params[f"b{li + 1}"].astype(jnp.float32)
        assert w.shape[1] == dims[-1], "layer dims must chain"
        dims.append(w.shape[0])
        flat.append(w.reshape(-1))
        flat.append(b.reshape(-1))
    assert dims[-1] == 1, "scaling head must have a single output"
    packed = jnp.concatenate(flat)                   # < 100 scalars for default cfg
    dims = tuple(dims)

    # ---- batch tiling: big tiles, >=2 grid steps when B allows (megacore) ---
    bt = max(_GRAIN, (int(batch_tile) // _GRAIN) * _GRAIN)
    if B > _GRAIN:
        bt = min(bt, pl.cdiv(B, 2 * _GRAIN) * _GRAIN)   # keep >=2 grid steps
    bt = min(bt, pl.cdiv(B, _GRAIN) * _GRAIN)           # never exceed padded batch
    B_pad = pl.cdiv(B, bt) * bt
    grid = (B_pad // bt,)

    # ---- input prep: one fused layout pass (pad + transpose + reshape) ------
    # Batch is folded onto sublanes AND lanes: x -> (in_dim, 8, B_pad/8).
    # x keeps its dtype (no cast pass, no bf16 quantization of the input).
    # TODO(synk): have the producer emit x already as (in_dim, 8, B/8) so this
    # transpose pass disappears entirely.
    xp = x if B_pad == B else jnp.pad(x, ((0, B_pad - B), (0, 0)))
    xT = xp.T.reshape(in_dim, _SUBLANE, B_pad // _SUBLANE)

    out_dtype = x.dtype

    # ---- VMEM budget: explicit limit so big tiles work on v5e (16MiB default
    # scoped) and stay under v7x's 64MiB physical VMEM. ------------------------
    x_bytes = in_dim * bt * jnp.dtype(x.dtype).itemsize
    o_bytes = bt * jnp.dtype(out_dtype).itemsize
    work_bytes = (max(dims) + max(dims[1:])) * bt * 4      # f32 working set
    vmem_limit = int(min(48 << 20,
                         max(32 << 20,
                             2 * (x_bytes + o_bytes) + work_bytes + (4 << 20))))

    kernel = functools.partial(
        _mlp_scaling_kernel, dims=dims, sigmoid_max=float(sigmoid_max),
        use_sigmoid=use_sigmoid, approx_recip=approx_recip)

    out = pl.pallas_call(
        kernel,
        out_shape=jax.ShapeDtypeStruct((_SUBLANE, B_pad // _SUBLANE), out_dtype),
        grid_spec=pltpu.PrefetchScalarGridSpec(
            num_scalar_prefetch=0,
            grid=grid,
            in_specs=[
                # single packed weight/bias operand, lives in SMEM
                pl.BlockSpec(memory_space=pltpu.MemorySpace.SMEM),
                # x tile: (in_dim, 8, bt/8), batch on sublanes + lanes
                pl.BlockSpec((in_dim, _SUBLANE, bt // _SUBLANE),
                             lambda i: (0, 0, i)),
            ],
            out_specs=pl.BlockSpec((_SUBLANE, bt // _SUBLANE), lambda i: (0, i)),
        ),
        compiler_params=pltpu.CompilerParams(
            dimension_semantics=("parallel",),
            vmem_limit_bytes=vmem_limit),
    )(packed, xT)

    # (8, B_pad/8) row-major flattens back to sample order; drop the pad tail.
    return out.reshape(-1)[:B].reshape(B, 1)


def init_params(key, in_dim=10, hidden_dims=(5, 5), init=0.4):
    """Mimics torch.nn.init.uniform_(-init, init) on weights; biases use
    PyTorch's default uniform(-1/sqrt(fan_in), 1/sqrt(fan_in)).
    Weights stored in torch nn.Linear layout (out_features, in_features)."""
    dims = [in_dim] + list(hidden_dims) + [1]
    params = {}
    keys = jax.random.split(key, 2 * (len(dims) - 1))
    for li, (i, o) in enumerate(zip(dims[:-1], dims[1:])):
        kw, kb = keys[2 * li], keys[2 * li + 1]
        w = jax.random.uniform(kw, (o, i), jnp.float32, minval=-init, maxval=init)
        bound = 1.0 / (i ** 0.5)
        b = jax.random.uniform(kb, (o,), jnp.float32, minval=-bound, maxval=bound)
        params[f"w{li + 1}"] = w
        params[f"b{li + 1}"] = b
    return params


def reference_forward(x, params, sigmoid_max=1.0):
    hi = jax.lax.Precision.HIGHEST
    z = jnp.maximum(jnp.dot(x, params["w1"].T, precision=hi) + params["b1"], 0.0)
    z = jnp.maximum(jnp.dot(z, params["w2"].T, precision=hi) + params["b2"], 0.0)
    z = jnp.dot(z, params["w3"].T, precision=hi) + params["b3"]
    return jax.nn.sigmoid(z) * sigmoid_max


if __name__ == "__main__":
    key = jax.random.PRNGKey(0)
    kx, kp = jax.random.split(key)

    B, IN_DIM = 16, 10
    SIGMOID_MAX = 2.0

    x = jax.random.normal(kx, (B, IN_DIM), dtype=jnp.float32)
    params = init_params(kp, in_dim=IN_DIM, hidden_dims=(5, 5), init=0.4)

    out = scaling_forward(x, params, sigmoid_max=SIGMOID_MAX)
    out = jax.block_until_ready(out)

    # All MLP math is exact f32 on the unquantized input; the only approximate
    # step is the EUP reciprocal in the sigmoid head (~2^-12 relative), so a
    # 2e-3 tolerance is ample while still catching any layout/weight bug.
    ref = reference_forward(x, params, sigmoid_max=SIGMOID_MAX)

    assert out.shape == (B, 1)
    max_err = float(jnp.max(jnp.abs(out - ref)))
    assert jnp.allclose(out, ref, atol=2e-3, rtol=2e-3), (
        f"mismatch vs reference, max abs err = {max_err}")

    print("KERNEL_OK")
</pallas_src>

<mosaic_0001>
module attributes {stable_mosaic.version = 11 : i64} {
  func.func @_mlp_scaling_kernel(%arg0: i32, %arg1: memref<91xf32, #tpu.memory_space<smem>>, %arg2: memref<10x8x128xf32, #tpu.memory_space<vmem>>, %arg3: memref<8x128xf32, #tpu.memory_space<vmem>>) attributes {dimension_semantics = [#tpu.dimension_semantics<parallel>], iteration_bounds = array<i64: 1>, scalar_prefetch = 0 : i64, scratch_operands = 0 : i64, tpu.core_type = #tpu.core_type<tc>, window_params = [{transform_indices = @transform_0, window_bounds = array<i64: 91>}, {transform_indices = @transform_1, window_bounds = array<i64: 10, 8, 128>}, {transform_indices = @transform_2, window_bounds = array<i64: 8, 128>}]} {
    %c0 = arith.constant 0 : index
    %c0_0 = arith.constant 0 : index
    %c0_1 = arith.constant 0 : index
    %0 = vector.load %arg2[%c0, %c0_0, %c0_1] : memref<10x8x128xf32, #tpu.memory_space<vmem>>, vector<1x8x128xf32>
    %1 = vector.shape_cast %0 : vector<1x8x128xf32> to vector<8x128xf32>
    %c1 = arith.constant 1 : index
    %c0_2 = arith.constant 0 : index
    %c0_3 = arith.constant 0 : index
    %2 = vector.load %arg2[%c1, %c0_2, %c0_3] : memref<10x8x128xf32, #tpu.memory_space<vmem>>, vector<1x8x128xf32>
    %3 = vector.shape_cast %2 : vector<1x8x128xf32> to vector<8x128xf32>
    %c2 = arith.constant 2 : index
    %c0_4 = arith.constant 0 : index
    %c0_5 = arith.constant 0 : index
    %4 = vector.load %arg2[%c2, %c0_4, %c0_5] : memref<10x8x128xf32, #tpu.memory_space<vmem>>, vector<1x8x128xf32>
    %5 = vector.shape_cast %4 : vector<1x8x128xf32> to vector<8x128xf32>
    %c3 = arith.constant 3 : index
    %c0_6 = arith.constant 0 : index
    %c0_7 = arith.constant 0 : index
    %6 = vector.load %arg2[%c3, %c0_6, %c0_7] : memref<10x8x128xf32, #tpu.memory_space<vmem>>, vector<1x8x128xf32>
    %7 = vector.shape_cast %6 : vector<1x8x128xf32> to vector<8x128xf32>
    %c4 = arith.constant 4 : index
    %c0_8 = arith.constant 0 : index
    %c0_9 = arith.constant 0 : index
    %8 = vector.load %arg2[%c4, %c0_8, %c0_9] : memref<10x8x128xf32, #tpu.memory_space<vmem>>, vector<1x8x128xf32>
    %9 = vector.shape_cast %8 : vector<1x8x128xf32> to vector<8x128xf32>
    %c5 = arith.constant 5 : index
    %c0_10 = arith.constant 0 : index
    %c0_11 = arith.constant 0 : index
    %10 = vector.load %arg2[%c5, %c0_10, %c0_11] : memref<10x8x128xf32, #tpu.memory_space<vmem>>, vector<1x8x128xf32>
    %11 = vector.shape_cast %10 : vector<1x8x128xf32> to vector<8x128xf32>
    %c6 = arith.constant 6 : index
    %c0_12 = arith.constant 0 : index
    %c0_13 = arith.constant 0 : index
    %12 = vector.load %arg2[%c6, %c0_12, %c0_13] : memref<10x8x128xf32, #tpu.memory_space<vmem>>, vector<1x8x128xf32>
    %13 = vector.shape_cast %12 : vector<1x8x128xf32> to vector<8x128xf32>
    %c7 = arith.constant 7 : index
    %c0_14 = arith.constant 0 : index
    %c0_15 = arith.constant 0 : index
    %14 = vector.load %arg2[%c7, %c0_14, %c0_15] : memref<10x8x128xf32, #tpu.memory_space<vmem>>, vector<1x8x128xf32>
    %15 = vector.shape_cast %14 : vector<1x8x128xf32> to vector<8x128xf32>
    %c8 = arith.constant 8 : index
    %c0_16 = arith.constant 0 : index
    %c0_17 = arith.constant 0 : index
    %16 = vector.load %arg2[%c8, %c0_16, %c0_17] : memref<10x8x128xf32, #tpu.memory_space<vmem>>, vector<1x8x128xf32>
    %17 = vector.shape_cast %16 : vector<1x8x128xf32> to vector<8x128xf32>
    %c9 = arith.constant 9 : index
    %c0_18 = arith.constant 0 : index
    %c0_19 = arith.constant 0 : index
    %18 = vector.load %arg2[%c9, %c0_18, %c0_19] : memref<10x8x128xf32, #tpu.memory_space<vmem>>, vector<1x8x128xf32>
    %19 = vector.shape_cast %18 : vector<1x8x128xf32> to vector<8x128xf32>
    %c0_20 = arith.constant 0 : index
    %20 = memref.load %arg1[%c0_20] : memref<91xf32, #tpu.memory_space<smem>>
    %21 = vector.broadcast %20 : f32 to vector<8x128xf32>
    %22 = arith.mulf %21, %1 : vector<8x128xf32>
    %c1_21 = arith.constant 1 : index
    %23 = memref.load %arg1[%c1_21] : memref<91xf32, #tpu.memory_space<smem>>
    %24 = vector.broadcast %23 : f32 to vector<8x128xf32>
    %25 = arith.mulf %24, %3 : vector<8x128xf32>
    %26 = arith.addf %22, %25 : vector<8x128xf32>
    %c2_22 = arith.constant 2 : index
    %27 = memref.load %arg1[%c2_22] : memref<91xf32, #tpu.memory_space<smem>>
    %28 = vector.broadcast %27 : f32 to vector<8x128xf32>
    %29 = arith.mulf %28, %5 : vector<8x128xf32>
    %30 = arith.addf %26, %29 : vector<8x128xf32>
    %c3_23 = arith.constant 3 : index
    %31 = memref.load %arg1[%c3_23] : memref<91xf32, #tpu.memory_space<smem>>
    %32 = vector.broadcast %31 : f32 to vector<8x128xf32>
    %33 = arith.mulf %32, %7 : vector<8x128xf32>
    %34 = arith.addf %30, %33 : vector<8x128xf32>
    %c4_24 = arith.constant 4 : index
    %35 = memref.load %arg1[%c4_24] : memref<91xf32, #tpu.memory_space<smem>>
    %36 = vector.broadcast %35 : f32 to vector<8x128xf32>
    %37 = arith.mulf %36, %9 : vector<8x128xf32>
    %38 = arith.addf %34, %37 : vector<8x128xf32>
    %c5_25 = arith.constant 5 : index
    %39 = memref.load %arg1[%c5_25] : memref<91xf32, #tpu.memory_space<smem>>
    %40 = vector.broadcast %39 : f32 to vector<8x128xf32>
    %41 = arith.mulf %40, %11 : vector<8x128xf32>
    %42 = arith.addf %38, %41 : vector<8x128xf32>
    %c6_26 = arith.constant 6 : index
    %43 = memref.load %arg1[%c6_26] : memref<91xf32, #tpu.memory_space<smem>>
    %44 = vector.broadcast %43 : f32 to vector<8x128xf32>
    %45 = arith.mulf %44, %13 : vector<8x128xf32>
    %46 = arith.addf %42, %45 : vector<8x128xf32>
    %c7_27 = arith.constant 7 : index
    %47 = memref.load %arg1[%c7_27] : memref<91xf32, #tpu.memory_space<smem>>
    %48 = vector.broadcast %47 : f32 to vector<8x128xf32>
    %49 = arith.mulf %48, %15 : vector<8x128xf32>
    %50 = arith.addf %46, %49 : vector<8x128xf32>
    %c8_28 = arith.constant 8 : index
    %51 = memref.load %arg1[%c8_28] : memref<91xf32, #tpu.memory_space<smem>>
    %52 = vector.broadcast %51 : f32 to vector<8x128xf32>
    %53 = arith.mulf %52, %17 : vector<8x128xf32>
    %54 = arith.addf %50, %53 : vector<8x128xf32>
    %c9_29 = arith.constant 9 : index
    %55 = memref.load %arg1[%c9_29] : memref<91xf32, #tpu.memory_space<smem>>
    %56 = vector.broadcast %55 : f32 to vector<8x128xf32>
    %57 = arith.mulf %56, %19 : vector<8x128xf32>
    %58 = arith.addf %54, %57 : vector<8x128xf32>
    %c50 = arith.constant 50 : index
    %59 = memref.load %arg1[%c50] : memref<91xf32, #tpu.memory_space<smem>>
    %60 = vector.broadcast %59 : f32 to vector<8x128xf32>
    %61 = arith.addf %58, %60 : vector<8x128xf32>
    %cst = arith.constant 0.000000e+00 : f32
    %62 = vector.broadcast %cst : f32 to vector<8x128xf32>
    %63 = arith.maximumf %61, %62 : vector<8x128xf32>
    %c10 = arith.constant 10 : index
    %64 = memref.load %arg1[%c10] : memref<91xf32, #tpu.memory_space<smem>>
    %65 = vector.broadcast %64 : f32 to vector<8x128xf32>
    %66 = arith.mulf %65, %1 : vector<8x128xf32>
    %c11 = arith.constant 11 : index
    %67 = memref.load %arg1[%c11] : memref<91xf32, #tpu.memory_space<smem>>
    %68 = vector.broadcast %67 : f32 to vector<8x128xf32>
    %69 = arith.mulf %68, %3 : vector<8x128xf32>
    %70 = arith.addf %66, %69 : vector<8x128xf32>
    %c12 = arith.constant 12 : index
    %71 = memref.load %arg1[%c12] : memref<91xf32, #tpu.memory_space<smem>>
    %72 = vector.broadcast %71 : f32 to vector<8x128xf32>
    %73 = arith.mulf %72, %5 : vector<8x128xf32>
    %74 = arith.addf %70, %73 : vector<8x128xf32>
    %c13 = arith.constant 13 : index
    %75 = memref.load %arg1[%c13] : memref<91xf32, #tpu.memory_space<smem>>
    %76 = vector.broadcast %75 : f32 to vector<8x128xf32>
    %77 = arith.mulf %76, %7 : vector<8x128xf32>
    %78 = arith.addf %74, %77 : vector<8x128xf32>
    %c14 = arith.constant 14 : index
    %79 = memref.load %arg1[%c14] : memref<91xf32, #tpu.memory_space<smem>>
    %80 = vector.broadcast %79 : f32 to vector<8x128xf32>
    %81 = arith.mulf %80, %9 : vector<8x128xf32>
    %82 = arith.addf %78, %81 : vector<8x128xf32>
    %c15 = arith.constant 15 : index
    %83 = memref.load %arg1[%c15] : memref<91xf32, #tpu.memory_space<smem>>
    %84 = vector.broadcast %83 : f32 to vector<8x128xf32>
    %85 = arith.mulf %84, %11 : vector<8x128xf32>
    %86 = arith.addf %82, %85 : vector<8x128xf32>
    %c16 = arith.constant 16 : index
    %87 = memref.load %arg1[%c16] : memref<91xf32, #tpu.memory_space<smem>>
    %88 = vector.broadcast %87 : f32 to vector<8x128xf32>
    %89 = arith.mulf %88, %13 : vector<8x128xf32>
    %90 = arith.addf %86, %89 : vector<8x128xf32>
    %c17 = arith.constant 17 : index
    %91 = memref.load %arg1[%c17] : memref<91xf32, #tpu.memory_space<smem>>
    %92 = vector.broadcast %91 : f32 to vector<8x128xf32>
    %93 = arith.mulf %92, %15 : vector<8x128xf32>
    %94 = arith.addf %90, %93 : vector<8x128xf32>
    %c18 = arith.constant 18 : index
    %95 = memref.load %arg1[%c18] : memref<91xf32, #tpu.memory_space<smem>>
    %96 = vector.broadcast %95 : f32 to vector<8x128xf32>
    %97 = arith.mulf %96, %17 : vector<8x128xf32>
    %98 = arith.addf %94, %97 : vector<8x128xf32>
    %c19 = arith.constant 19 : index
    %99 = memref.load %arg1[%c19] : memref<91xf32, #tpu.memory_space<smem>>
    %100 = vector.broadcast %99 : f32 to vector<8x128xf32>
    %101 = arith.mulf %100, %19 : vector<8x128xf32>
    %102 = arith.addf %98, %101 : vector<8x128xf32>
    %c51 = arith.constant 51 : index
    %103 = memref.load %arg1[%c51] : memref<91xf32, #tpu.memory_space<smem>>
    %104 = vector.broadcast %103 : f32 to vector<8x128xf32>
    %105 = arith.addf %102, %104 : vector<8x128xf32>
    %cst_30 = arith.constant 0.000000e+00 : f32
    %106 = vector.broadcast %cst_30 : f32 to vector<8x128xf32>
    %107 = arith.maximumf %105, %106 : vector<8x128xf32>
    %c20 = arith.constant 20 : index
    %108 = memref.load %arg1[%c20] : memref<91xf32, #tpu.memory_space<smem>>
    %109 = vector.broadcast %108 : f32 to vector<8x128xf32>
    %110 = arith.mulf %109, %1 : vector<8x128xf32>
    %c21 = arith.constant 21 : index
    %111 = memref.load %arg1[%c21] : memref<91xf32, #tpu.memory_space<smem>>
    %112 = vector.broadcast %111 : f32 to vector<8x128xf32>
    %113 = arith.mulf %112, %3 : vector<8x128xf32>
    %114 = arith.addf %110, %113 : vector<8x128xf32>
    %c22 = arith.constant 22 : index
    %115 = memref.load %arg1[%c22] : memref<91xf32, #tpu.memory_space<smem>>
    %116 = vector.broadcast %115 : f32 to vector<8x128xf32>
    %117 = arith.mulf %116, %5 : vector<8x128xf32>
    %118 = arith.addf %114, %117 : vector<8x128xf32>
    %c23 = arith.constant 23 : index
    %119 = memref.load %arg1[%c23] : memref<91xf32, #tpu.memory_space<smem>>
    %120 = vector.broadcast %119 : f32 to vector<8x128xf32>
    %121 = arith.mulf %120, %7 : vector<8x128xf32>
    %122 = arith.addf %118, %121 : vector<8x128xf32>
    %c24 = arith.constant 24 : index
    %123 = memref.load %arg1[%c24] : memref<91xf32, #tpu.memory_space<smem>>
    %124 = vector.broadcast %123 : f32 to vector<8x128xf32>
    %125 = arith.mulf %124, %9 : vector<8x128xf32>
    %126 = arith.addf %122, %125 : vector<8x128xf32>
    %c25 = arith.constant 25 : index
    %127 = memref.load %arg1[%c25] : memref<91xf32, #tpu.memory_space<smem>>
    %128 = vector.broadcast %127 : f32 to vector<8x128xf32>
    %129 = arith.mulf %128, %11 : vector<8x128xf32>
    %130 = arith.addf %126, %129 : vector<8x128xf32>
    %c26 = arith.constant 26 : index
    %131 = memref.load %arg1[%c26] : memref<91xf32, #tpu.memory_space<smem>>
    %132 = vector.broadcast %131 : f32 to vector<8x128xf32>
    %133 = arith.mulf %132, %13 : vector<8x128xf32>
    %134 = arith.addf %130, %133 : vector<8x128xf32>
    %c27 = arith.constant 27 : index
    %135 = memref.load %arg1[%c27] : memref<91xf32, #tpu.memory_space<smem>>
    %136 = vector.broadcast %135 : f32 to vector<8x128xf32>
    %137 = arith.mulf %136, %15 : vector<8x128xf32>
    %138 = arith.addf %134, %137 : vector<8x128xf32>
    %c28 = arith.constant 28 : index
    %139 = memref.load %arg1[%c28] : memref<91xf32, #tpu.memory_space<smem>>
    %140 = vector.broadcast %139 : f32 to vector<8x128xf32>
    %141 = arith.mulf %140, %17 : vector<8x128xf32>
    %142 = arith.addf %138, %141 : vector<8x128xf32>
    %c29 = arith.constant 29 : index
    %143 = memref.load %arg1[%c29] : memref<91xf32, #tpu.memory_space<smem>>
    %144 = vector.broadcast %143 : f32 to vector<8x128xf32>
    %145 = arith.mulf %144, %19 : vector<8x128xf32>
    %146 = arith.addf %142, %145 : vector<8x128xf32>
    %c52 = arith.constant 52 : index
    %147 = memref.load %arg1[%c52] : memref<91xf32, #tpu.memory_space<smem>>
    %148 = vector.broadcast %147 : f32 to vector<8x128xf32>
    %149 = arith.addf %146, %148 : vector<8x128xf32>
    %cst_31 = arith.constant 0.000000e+00 : f32
    %150 = vector.broadcast %cst_31 : f32 to vector<8x128xf32>
    %151 = arith.maximumf %149, %150 : vector<8x128xf32>
    %c30 = arith.constant 30 : index
    %152 = memref.load %arg1[%c30] : memref<91xf32, #tpu.memory_space<smem>>
    %153 = vector.broadcast %152 : f32 to vector<8x128xf32>
    %154 = arith.mulf %153, %1 : vector<8x128xf32>
    %c31 = arith.constant 31 : index
    %155 = memref.load %arg1[%c31] : memref<91xf32, #tpu.memory_space<smem>>
    %156 = vector.broadcast %155 : f32 to vector<8x128xf32>
    %157 = arith.mulf %156, %3 : vector<8x128xf32>
    %158 = arith.addf %154, %157 : vector<8x128xf32>
    %c32 = arith.constant 32 : index
    %159 = memref.load %arg1[%c32] : memref<91xf32, #tpu.memory_space<smem>>
    %160 = vector.broadcast %159 : f32 to vector<8x128xf32>
    %161 = arith.mulf %160, %5 : vector<8x128xf32>
    %162 = arith.addf %158, %161 : vector<8x128xf32>
    %c33 = arith.constant 33 : index
    %163 = memref.load %arg1[%c33] : memref<91xf32, #tpu.memory_space<smem>>
    %164 = vector.broadcast %163 : f32 to vector<8x128xf32>
    %165 = arith.mulf %164, %7 : vector<8x128xf32>
    %166 = arith.addf %162, %165 : vector<8x128xf32>
    %c34 = arith.constant 34 : index
    %167 = memref.load %arg1[%c34] : memref<91xf32, #tpu.memory_space<smem>>
    %168 = vector.broadcast %167 : f32 to vector<8x128xf32>
    %169 = arith.mulf %168, %9 : vector<8x128xf32>
    %170 = arith.addf %166, %169 : vector<8x128xf32>
    %c35 = arith.constant 35 : index
    %171 = memref.load %arg1[%c35] : memref<91xf32, #tpu.memory_space<smem>>
    %172 = vector.broadcast %171 : f32 to vector<8x128xf32>
    %173 = arith.mulf %172, %11 : vector<8x128xf32>
    %174 = arith.addf %170, %173 : vector<8x128xf32>
    %c36 = arith.constant 36 : index
    %175 = memref.load %arg1[%c36] : memref<91xf32, #tpu.memory_space<smem>>
    %176 = vector.broadcast %175 : f32 to vector<8x128xf32>
    %177 = arith.mulf %176, %13 : vector<8x128xf32>
    %178 = arith.addf %174, %177 : vector<8x128xf32>
    %c37 = arith.constant 37 : index
    %179 = memref.load %arg1[%c37] : memref<91xf32, #tpu.memory_space<smem>>
    %180 = vector.broadcast %179 : f32 to vector<8x128xf32>
    %181 = arith.mulf %180, %15 : vector<8x128xf32>
    %182 = arith.addf %178, %181 : vector<8x128xf32>
    %c38 = arith.constant 38 : index
    %183 = memref.load %arg1[%c38] : memref<91xf32, #tpu.memory_space<smem>>
    %184 = vector.broadcast %183 : f32 to vector<8x128xf32>
    %185 = arith.mulf %184, %17 : vector<8x128xf32>
    %186 = arith.addf %182, %185 : vector<8x128xf32>
    %c39 = arith.constant 39 : index
    %187 = memref.load %arg1[%c39] : memref<91xf32, #tpu.memory_space<smem>>
    %188 = vector.broadcast %187 : f32 to vector<8x128xf32>
    %189 = arith.mulf %188, %19 : vector<8x128xf32>
    %190 = arith.addf %186, %189 : vector<8x128xf32>
    %c53 = arith.constant 53 : index
    %191 = memref.load %arg1[%c53] : memref<91xf32, #tpu.memory_space<smem>>
    %192 = vector.broadcast %191 : f32 to vector<8x128xf32>
    %193 = arith.addf %190, %192 : vector<8x128xf32>
    %cst_32 = arith.constant 0.000000e+00 : f32
    %194 = vector.broadcast %cst_32 : f32 to vector<8x128xf32>
    %195 = arith.maximumf %193, %194 : vector<8x128xf32>
    %c40 = arith.constant 40 : index
    %196 = memref.load %arg1[%c40] : memref<91xf32, #tpu.memory_space<smem>>
    %197 = vector.broadcast %196 : f32 to vector<8x128xf32>
    %198 = arith.mulf %197, %1 : vector<8x128xf32>
    %c41 = arith.constant 41 : index
    %199 = memref.load %arg1[%c41] : memref<91xf32, #tpu.memory_space<smem>>
    %200 = vector.broadcast %199 : f32 to vector<8x128xf32>
    %201 = arith.mulf %200, %3 : vector<8x128xf32>
    %202 = arith.addf %198, %201 : vector<8x128xf32>
    %c42 = arith.constant 42 : index
    %203 = memref.load %arg1[%c42] : memref<91xf32, #tpu.memory_space<smem>>
    %204 = vector.broadcast %203 : f32 to vector<8x128xf32>
    %205 = arith.mulf %204, %5 : vector<8x128xf32>
    %206 = arith.addf %202, %205 : vector<8x128xf32>
    %c43 = arith.constant 43 : index
    %207 = memref.load %arg1[%c43] : memref<91xf32, #tpu.memory_space<smem>>
    %208 = vector.broadcast %207 : f32 to vector<8x128xf32>
    %209 = arith.mulf %208, %7 : vector<8x128xf32>
    %210 = arith.addf %206, %209 : vector<8x128xf32>
    %c44 = arith.constant 44 : index
    %211 = memref.load %arg1[%c44] : memref<91xf32, #tpu.memory_space<smem>>
    %212 = vector.broadcast %211 : f32 to vector<8x128xf32>
    %213 = arith.mulf %212, %9 : vector<8x128xf32>
    %214 = arith.addf %210, %213 : vector<8x128xf32>
    %c45 = arith.constant 45 : index
    %215 = memref.load %arg1[%c45] : memref<91xf32, #tpu.memory_space<smem>>
    %216 = vector.broadcast %215 : f32 to vector<8x128xf32>
    %217 = arith.mulf %216, %11 : vector<8x128xf32>
    %218 = arith.addf %214, %217 : vector<8x128xf32>
    %c46 = arith.constant 46 : index
    %219 = memref.load %arg1[%c46] : memref<91xf32, #tpu.memory_space<smem>>
    %220 = vector.broadcast %219 : f32 to vector<8x128xf32>
    %221 = arith.mulf %220, %13 : vector<8x128xf32>
    %222 = arith.addf %218, %221 : vector<8x128xf32>
    %c47 = arith.constant 47 : index
    %223 = memref.load %arg1[%c47] : memref<91xf32, #tpu.memory_space<smem>>
    %224 = vector.broadcast %223 : f32 to vector<8x128xf32>
    %225 = arith.mulf %224, %15 : vector<8x128xf32>
    %226 = arith.addf %222, %225 : vector<8x128xf32>
    %c48 = arith.constant 48 : index
    %227 = memref.load %arg1[%c48] : memref<91xf32, #tpu.memory_space<smem>>
    %228 = vector.broadcast %227 : f32 to vector<8x128xf32>
    %229 = arith.mulf %228, %17 : vector<8x128xf32>
    %230 = arith.addf %226, %229 : vector<8x128xf32>
    %c49 = arith.constant 49 : index
    %231 = memref.load %arg1[%c49] : memref<91xf32, #tpu.memory_space<smem>>
    %232 = vector.broadcast %231 : f32 to vector<8x128xf32>
    %233 = arith.mulf %232, %19 : vector<8x128xf32>
    %234 = arith.addf %230, %233 : vector<8x128xf32>
    %c54 = arith.constant 54 : index
    %235 = memref.load %arg1[%c54] : memref<91xf32, #tpu.memory_space<smem>>
    %236 = vector.broadcast %235 : f32 to vector<8x128xf32>
    %237 = arith.addf %234, %236 : vector<8x128xf32>
    %cst_33 = arith.constant 0.000000e+00 : f32
    %238 = vector.broadcast %cst_33 : f32 to vector<8x128xf32>
    %239 = arith.maximumf %237, %238 : vector<8x128xf32>
    %c55 = arith.constant 55 : index
    %240 = memref.load %arg1[%c55] : memref<91xf32, #tpu.memory_space<smem>>
    %241 = vector.broadcast %240 : f32 to vector<8x128xf32>
    %242 = arith.mulf %241, %63 : vector<8x128xf32>
    %c56 = arith.constant 56 : index
    %243 = memref.load %arg1[%c56] : memref<91xf32, #tpu.memory_space<smem>>
    %244 = vector.broadcast %243 : f32 to vector<8x128xf32>
    %245 = arith.mulf %244, %107 : vector<8x128xf32>
    %246 = arith.addf %242, %245 : vector<8x128xf32>
    %c57 = arith.constant 57 : index
    %247 = memref.load %arg1[%c57] : memref<91xf32, #tpu.memory_space<smem>>
    %248 = vector.broadcast %247 : f32 to vector<8x128xf32>
    %249 = arith.mulf %248, %151 : vector<8x128xf32>
    %250 = arith.addf %246, %249 : vector<8x128xf32>
    %c58 = arith.constant 58 : index
    %251 = memref.load %arg1[%c58] : memref<91xf32, #tpu.memory_space<smem>>
    %252 = vector.broadcast %251 : f32 to vector<8x128xf32>
    %253 = arith.mulf %252, %195 : vector<8x128xf32>
    %254 = arith.addf %250, %253 : vector<8x128xf32>
    %c59 = arith.constant 59 : index
    %255 = memref.load %arg1[%c59] : memref<91xf32, #tpu.memory_space<smem>>
    %256 = vector.broadcast %255 : f32 to vector<8x128xf32>
    %257 = arith.mulf %256, %239 : vector<8x128xf32>
    %258 = arith.addf %254, %257 : vector<8x128xf32>
    %c80 = arith.constant 80 : index
    %259 = memref.load %arg1[%c80] : memref<91xf32, #tpu.memory_space<smem>>
    %260 = vector.broadcast %259 : f32 to vector<8x128xf32>
    %261 = arith.addf %258, %260 : vector<8x128xf32>
    %cst_34 = arith.constant 0.000000e+00 : f32
    %262 = vector.broadcast %cst_34 : f32 to vector<8x128xf32>
    %263 = arith.maximumf %261, %262 : vector<8x128xf32>
    %c60 = arith.constant 60 : index
    %264 = memref.load %arg1[%c60] : memref<91xf32, #tpu.memory_space<smem>>
    %265 = vector.broadcast %264 : f32 to vector<8x128xf32>
    %266 = arith.mulf %265, %63 : vector<8x128xf32>
    %c61 = arith.constant 61 : index
    %267 = memref.load %arg1[%c61] : memref<91xf32, #tpu.memory_space<smem>>
    %268 = vector.broadcast %267 : f32 to vector<8x128xf32>
    %269 = arith.mulf %268, %107 : vector<8x128xf32>
    %270 = arith.addf %266, %269 : vector<8x128xf32>
    %c62 = arith.constant 62 : index
    %271 = memref.load %arg1[%c62] : memref<91xf32, #tpu.memory_space<smem>>
    %272 = vector.broadcast %271 : f32 to vector<8x128xf32>
    %273 = arith.mulf %272, %151 : vector<8x128xf32>
    %274 = arith.addf %270, %273 : vector<8x128xf32>
    %c63 = arith.constant 63 : index
    %275 = memref.load %arg1[%c63] : memref<91xf32, #tpu.memory_space<smem>>
    %276 = vector.broadcast %275 : f32 to vector<8x128xf32>
    %277 = arith.mulf %276, %195 : vector<8x128xf32>
    %278 = arith.addf %274, %277 : vector<8x128xf32>
    %c64 = arith.constant 64 : index
    %279 = memref.load %arg1[%c64] : memref<91xf32, #tpu.memory_space<smem>>
    %280 = vector.broadcast %279 : f32 to vector<8x128xf32>
    %281 = arith.mulf %280, %239 : vector<8x128xf32>
    %282 = arith.addf %278, %281 : vector<8x128xf32>
    %c81 = arith.constant 81 : index
    %283 = memref.load %arg1[%c81] : memref<91xf32, #tpu.memory_space<smem>>
    %284 = vector.broadcast %283 : f32 to vector<8x128xf32>
    %285 = arith.addf %282, %284 : vector<8x128xf32>
    %cst_35 = arith.constant 0.000000e+00 : f32
    %286 = vector.broadcast %cst_35 : f32 to vector<8x128xf32>
    %287 = arith.maximumf %285, %286 : vector<8x128xf32>
    %c65 = arith.constant 65 : index
    %288 = memref.load %arg1[%c65] : memref<91xf32, #tpu.memory_space<smem>>
    %289 = vector.broadcast %288 : f32 to vector<8x128xf32>
    %290 = arith.mulf %289, %63 : vector<8x128xf32>
    %c66 = arith.constant 66 : index
    %291 = memref.load %arg1[%c66] : memref<91xf32, #tpu.memory_space<smem>>
    %292 = vector.broadcast %291 : f32 to vector<8x128xf32>
    %293 = arith.mulf %292, %107 : vector<8x128xf32>
    %294 = arith.addf %290, %293 : vector<8x128xf32>
    %c67 = arith.constant 67 : index
    %295 = memref.load %arg1[%c67] : memref<91xf32, #tpu.memory_space<smem>>
    %296 = vector.broadcast %295 : f32 to vector<8x128xf32>
    %297 = arith.mulf %296, %151 : vector<8x128xf32>
    %298 = arith.addf %294, %297 : vector<8x128xf32>
    %c68 = arith.constant 68 : index
    %299 = memref.load %arg1[%c68] : memref<91xf32, #tpu.memory_space<smem>>
    %300 = vector.broadcast %299 : f32 to vector<8x128xf32>
    %301 = arith.mulf %300, %195 : vector<8x128xf32>
    %302 = arith.addf %298, %301 : vector<8x128xf32>
    %c69 = arith.constant 69 : index
    %303 = memref.load %arg1[%c69] : memref<91xf32, #tpu.memory_space<smem>>
    %304 = vector.broadcast %303 : f32 to vector<8x128xf32>
    %305 = arith.mulf %304, %239 : vector<8x128xf32>
    %306 = arith.addf %302, %305 : vector<8x128xf32>
    %c82 = arith.constant 82 : index
    %307 = memref.load %arg1[%c82] : memref<91xf32, #tpu.memory_space<smem>>
    %308 = vector.broadcast %307 : f32 to vector<8x128xf32>
    %309 = arith.addf %306, %308 : vector<8x128xf32>
    %cst_36 = arith.constant 0.000000e+00 : f32
    %310 = vector.broadcast %cst_36 : f32 to vector<8x128xf32>
    %311 = arith.maximumf %309, %310 : vector<8x128xf32>
    %c70 = arith.constant 70 : index
    %312 = memref.load %arg1[%c70] : memref<91xf32, #tpu.memory_space<smem>>
    %313 = vector.broadcast %312 : f32 to vector<8x128xf32>
    %314 = arith.mulf %313, %63 : vector<8x128xf32>
    %c71 = arith.constant 71 : index
    %315 = memref.load %arg1[%c71] : memref<91xf32, #tpu.memory_space<smem>>
    %316 = vector.broadcast %315 : f32 to vector<8x128xf32>
    %317 = arith.mulf %316, %107 : vector<8x128xf32>
    %318 = arith.addf %314, %317 : vector<8x128xf32>
    %c72 = arith.constant 72 : index
    %319 = memref.load %arg1[%c72] : memref<91xf32, #tpu.memory_space<smem>>
    %320 = vector.broadcast %319 : f32 to vector<8x128xf32>
    %321 = arith.mulf %320, %151 : vector<8x128xf32>
    %322 = arith.addf %318, %321 : vector<8x128xf32>
    %c73 = arith.constant 73 : index
    %323 = memref.load %arg1[%c73] : memref<91xf32, #tpu.memory_space<smem>>
    %324 = vector.broadcast %323 : f32 to vector<8x128xf32>
    %325 = arith.mulf %324, %195 : vector<8x128xf32>
    %326 = arith.addf %322, %325 : vector<8x128xf32>
    %c74 = arith.constant 74 : index
    %327 = memref.load %arg1[%c74] : memref<91xf32, #tpu.memory_space<smem>>
    %328 = vector.broadcast %327 : f32 to vector<8x128xf32>
    %329 = arith.mulf %328, %239 : vector<8x128xf32>
    %330 = arith.addf %326, %329 : vector<8x128xf32>
    %c83 = arith.constant 83 : index
    %331 = memref.load %arg1[%c83] : memref<91xf32, #tpu.memory_space<smem>>
    %332 = vector.broadcast %331 : f32 to vector<8x128xf32>
    %333 = arith.addf %330, %332 : vector<8x128xf32>
    %cst_37 = arith.constant 0.000000e+00 : f32
    %334 = vector.broadcast %cst_37 : f32 to vector<8x128xf32>
    %335 = arith.maximumf %333, %334 : vector<8x128xf32>
    %c75 = arith.constant 75 : index
    %336 = memref.load %arg1[%c75] : memref<91xf32, #tpu.memory_space<smem>>
    %337 = vector.broadcast %336 : f32 to vector<8x128xf32>
    %338 = arith.mulf %337, %63 : vector<8x128xf32>
    %c76 = arith.constant 76 : index
    %339 = memref.load %arg1[%c76] : memref<91xf32, #tpu.memory_space<smem>>
    %340 = vector.broadcast %339 : f32 to vector<8x128xf32>
    %341 = arith.mulf %340, %107 : vector<8x128xf32>
    %342 = arith.addf %338, %341 : vector<8x128xf32>
    %c77 = arith.constant 77 : index
    %343 = memref.load %arg1[%c77] : memref<91xf32, #tpu.memory_space<smem>>
    %344 = vector.broadcast %343 : f32 to vector<8x128xf32>
    %345 = arith.mulf %344, %151 : vector<8x128xf32>
    %346 = arith.addf %342, %345 : vector<8x128xf32>
    %c78 = arith.constant 78 : index
    %347 = memref.load %arg1[%c78] : memref<91xf32, #tpu.memory_space<smem>>
    %348 = vector.broadcast %347 : f32 to vector<8x128xf32>
    %349 = arith.mulf %348, %195 : vector<8x128xf32>
    %350 = arith.addf %346, %349 : vector<8x128xf32>
    %c79 = arith.constant 79 : index
    %351 = memref.load %arg1[%c79] : memref<91xf32, #tpu.memory_space<smem>>
    %352 = vector.broadcast %351 : f32 to vector<8x128xf32>
    %353 = arith.mulf %352, %239 : vector<8x128xf32>
    %354 = arith.addf %350, %353 : vector<8x128xf32>
    %c84 = arith.constant 84 : index
    %355 = memref.load %arg1[%c84] : memref<91xf32, #tpu.memory_space<smem>>
    %356 = vector.broadcast %355 : f32 to vector<8x128xf32>
    %357 = arith.addf %354, %356 : vector<8x128xf32>
    %cst_38 = arith.constant 0.000000e+00 : f32
    %358 = vector.broadcast %cst_38 : f32 to vector<8x128xf32>
    %359 = arith.maximumf %357, %358 : vector<8x128xf32>
    %c85 = arith.constant 85 : index
    %360 = memref.load %arg1[%c85] : memref<91xf32, #tpu.memory_space<smem>>
    %361 = vector.broadcast %360 : f32 to vector<8x128xf32>
    %362 = arith.mulf %361, %263 : vector<8x128xf32>
    %c86 = arith.constant 86 : index
    %363 = memref.load %arg1[%c86] : memref<91xf32, #tpu.memory_space<smem>>
    %364 = vector.broadcast %363 : f32 to vector<8x128xf32>
    %365 = arith.mulf %364, %287 : vector<8x128xf32>
    %366 = arith.addf %362, %365 : vector<8x128xf32>
    %c87 = arith.constant 87 : index
    %367 = memref.load %arg1[%c87] : memref<91xf32, #tpu.memory_space<smem>>
    %368 = vector.broadcast %367 : f32 to vector<8x128xf32>
    %369 = arith.mulf %368, %311 : vector<8x128xf32>
    %370 = arith.addf %366, %369 : vector<8x128xf32>
    %c88 = arith.constant 88 : index
    %371 = memref.load %arg1[%c88] : memref<91xf32, #tpu.memory_space<smem>>
    %372 = vector.broadcast %371 : f32 to vector<8x128xf32>
    %373 = arith.mulf %372, %335 : vector<8x128xf32>
    %374 = arith.addf %370, %373 : vector<8x128xf32>
    %c89 = arith.constant 89 : index
    %375 = memref.load %arg1[%c89] : memref<91xf32, #tpu.memory_space<smem>>
    %376 = vector.broadcast %375 : f32 to vector<8x128xf32>
    %377 = arith.mulf %376, %359 : vector<8x128xf32>
    %378 = arith.addf %374, %377 : vector<8x128xf32>
    %c90 = arith.constant 90 : index
    %379 = memref.load %arg1[%c90] : memref<91xf32, #tpu.memory_space<smem>>
    %380 = vector.broadcast %379 : f32 to vector<8x128xf32>
    %381 = arith.addf %378, %380 : vector<8x128xf32>
    %cst_39 = arith.constant 0.000000e+00 : f32
    %382 = vector.broadcast %cst_39 : f32 to vector<8x128xf32>
    %383 = arith.subf %382, %381 : vector<8x128xf32>
    %384 = math.exp %383 : vector<8x128xf32>
    %cst_40 = arith.constant 1.000000e+00 : f32
    %385 = vector.broadcast %cst_40 : f32 to vector<8x128xf32>
    %386 = arith.addf %385, %384 : vector<8x128xf32>
    %387 = tpu.reciprocal %386 {approx = true} : vector<8x128xf32> -> vector<8x128xf32>
    %cst_41 = arith.constant 2.000000e+00 : f32
    %388 = vector.broadcast %cst_41 : f32 to vector<8x128xf32>
    %389 = arith.mulf %387, %388 : vector<8x128xf32>
    %c0_42 = arith.constant 0 : index
    %c0_43 = arith.constant 0 : index
    %390 = vector.load %arg3[%c0_42, %c0_43] : memref<8x128xf32, #tpu.memory_space<vmem>>, vector<8x128xf32>
    tpu.vector_store %arg3[%c0_42, %c0_43], %389 {strides = array<i32>} : memref<8x128xf32, #tpu.memory_space<vmem>>, vector<8x128xf32>,
    return
  }
  func.func @transform_0(%arg0: i32) -> i32 {
    %c0_i32 = arith.constant 0 : i32
    %c0_i32_0 = arith.constant 0 : i32
    return %c0_i32 : i32
  }
  func.func @transform_1(%arg0: i32) -> (i32, i32, i32) {
    %c0_i32 = arith.constant 0 : i32
    %c0_i32_0 = arith.constant 0 : i32
    %c0_i32_1 = arith.constant 0 : i32
    return %c0_i32, %c0_i32_0, %arg0 : i32, i32, i32
  }
  func.func @transform_2(%arg0: i32) -> (i32, i32) {
    %c0_i32 = arith.constant 0 : i32
    %c0_i32_0 = arith.constant 0 : i32
    return %c0_i32, %arg0 : i32, i32
  }
}

</mosaic_0001>

<llo_original>
// kernel: tpu_custom_call.1
$region0: #{tpu_custom_call.1}
  #allocation0 [shape = 'u32[]', space=smem, size = 0x4, offset = 0x4, fixed_abs, tag = 'smem constant byte address 0x4 - core index']
  #allocation1 [shape = 'u32[144,128]{1,0:T(1,128)}', space=vmem, size = 0x12000, scoped, tag = 'internal scratch']
  %s0 = inlined_call_operand.hbm [shape: f32[91], index: 0, kind: input, shape index: {}]
  %s1 = inlined_call_operand.hbm [shape: f32[10,8,128], index: 1, kind: input, shape index: {}]
  %s2 = inlined_call_operand.hbm [shape: f32[8,128], index: 2, kind: output, shape index: {}]
  %s3 = sld [smem:[#allocation0]]
  $region26: #{tpu_custom_call.1} parent=0
    _
  %s5 = ssub.s32 1, %s3
  %s6 = scalar_select 0, %s5, %s3
  $region1: #{tpu_custom_call.1} parent=0
    #allocation2 [shape = 'u8[512]{0}', space=smem, size = 0x200, scoped, tag = 'input window, operand 0, single buffered']
    #allocation3 [shape = 's32[1]{0}', space=sflag, size = 0x4, scoped, tag = 'scoped memory for tpu_custom_call.1']
    #allocation4 [shape = 's32[1]{0}', space=sflag, size = 0x4, scoped, tag = 'scoped memory for tpu_custom_call.1']
    #allocation5 [shape = 's32[1]{0}', space=sflag, size = 0x4, scoped, tag = 'scoped memory for tpu_custom_call.1']
    #allocation6 [shape = 'u8[40960]{0}', space=vmem, size = 0xa000, scoped, tag = 'input window, operand 1, single buffered']
    #allocation7 [shape = 'u8[4096]{0}', space=vmem, size = 0x1000, scoped, tag = 'output window, operand 0, single buffered']
    %7 = vsyncpa [#allocation5], 0
    %8 = vsyncpa [#allocation3], 0
    %9 = vsyncpa [#allocation4], 0
    // Predicated region
    $region2: #{tpu_custom_call.1} parent=1 // pred_check
      _
    $region3: #{tpu_custom_call.1} parent=1 // pred_check_branch
      %11 = sbr.rel (0) target = $region5
    $region4: #{tpu_custom_call.1} parent=1 // pred_region
      %s13 = ssub.s32 16, 16
      %14 = vsyncadd [#allocation5], %s13
      %17 = dma.hbm_to_smem %s0, 16, [#allocation2], [#allocation5]
    $region5: #{tpu_custom_call.1} parent=1 // pred_fallthru
      _
    // Predicated region
    $region6: #{tpu_custom_call.1} parent=1 // pred_check
      _
    $region7: #{tpu_custom_call.1} parent=1 // pred_check_branch
      %19 = sbr.rel (0) target = $region9
    $region8: #{tpu_custom_call.1} parent=1 // pred_region
      %s21 = ssub.s32 1280, 1280
      %22 = vsyncadd [#allocation3], %s21
      %s23 = sshll.u32 [#allocation6], 4
      %s24 = int_to_ptr.vmem [resolvable:$true] %s23
      %29 = dma.hbm_to_vmem [thread:$0]  %s1, 1280, %s24, [#allocation3], 128, 128, 8
    $region9: #{tpu_custom_call.1} parent=1 // pred_fallthru
      _
    // Predicated region
    $region10: #{tpu_custom_call.1} parent=1 // pred_check
      _
    $region11: #{tpu_custom_call.1} parent=1 // pred_check_branch
      %31 = sbr.rel (0) target = $region13
    $region12: #{tpu_custom_call.1} parent=1 // pred_region
      %32 = dma.done [#allocation5], 16
    $region13: #{tpu_custom_call.1} parent=1 // pred_fallthru
      _
    // Predicated region
    $region14: #{tpu_custom_call.1} parent=1 // pred_check
      _
    $region15: #{tpu_custom_call.1} parent=1 // pred_check_branch
      %34 = sbr.rel (0) target = $region17
    $region16: #{tpu_custom_call.1} parent=1 // pred_region
      %35 = dma.done [#allocation3], 1280
    $region17: #{tpu_custom_call.1} parent=1 // pred_fallthru
      _
    %36 = sfence
    %v37 = vld [vmem:[#allocation6] sm:$0xff]
    %s38 = scalar_lea.vmem [#allocation6], 8
    %v39 = vld [vmem:[%s38] sm:$0xff]
    %s40 = scalar_lea.vmem [#allocation6], 16
    %v41 = vld [vmem:[%s40] sm:$0xff]
    %s42 = scalar_lea.vmem [#allocation6], 24
    %v43 = vld [vmem:[%s42] sm:$0xff]
    %s44 = scalar_lea.vmem [#allocation6], 32
    %v45 = vld [vmem:[%s44] sm:$0xff]
    %s46 = scalar_lea.vmem [#allocation6], 40
    %v47 = vld [vmem:[%s46] sm:$0xff]
    %s48 = scalar_lea.vmem [#allocation6], 48
    %v49 = vld [vmem:[%s48] sm:$0xff]
    %s50 = scalar_lea.vmem [#allocation6], 56
    %v51 = vld [vmem:[%s50] sm:$0xff]
    %s52 = scalar_lea.vmem [#allocation6], 64
    %v53 = vld [vmem:[%s52] sm:$0xff]
    %s54 = scalar_lea.vmem [#allocation6], 72
    %v55 = vld [vmem:[%s54] sm:$0xff]
    %s56 = sld [smem:[#allocation2]]
    %v57 = vstv %s56
    %v58 = vmul.f32 %v57, %v37
    %s59 = sld [smem:[#allocation2 + $0x1]]
    %v60 = vstv %s59
    %v61 = vmul.f32 %v60, %v39
    %v62 = vadd.f32 %v58, %v61
    %s63 = sld [smem:[#allocation2 + $0x2]]
    %v64 = vstv %s63
    %v65 = vmul.f32 %v64, %v41
    %v66 = vadd.f32 %v62, %v65
    %s67 = sld [smem:[#allocation2 + $0x3]]
    %v68 = vstv %s67
    %v69 = vmul.f32 %v68, %v43
    %v70 = vadd.f32 %v66, %v69
    %s71 = sld [smem:[#allocation2 + $0x4]]
    %v72 = vstv %s71
    %v73 = vmul.f32 %v72, %v45
    %v74 = vadd.f32 %v70, %v73
    %s75 = sld [smem:[#allocation2 + $0x5]]
    %v76 = vstv %s75
    %v77 = vmul.f32 %v76, %v47
    %v78 = vadd.f32 %v74, %v77
    %s79 = sld [smem:[#allocation2 + $0x6]]
    %v80 = vstv %s79
    %v81 = vmul.f32 %v80, %v49
    %v82 = vadd.f32 %v78, %v81
    %s83 = sld [smem:[#allocation2 + $0x7]]
    %v84 = vstv %s83
    %v85 = vmul.f32 %v84, %v51
    %v86 = vadd.f32 %v82, %v85
    %s87 = sld [smem:[#allocation2 + $0x8]]
    %v88 = vstv %s87
    %v89 = vmul.f32 %v88, %v53
    %v90 = vadd.f32 %v86, %v89
    %s91 = sld [smem:[#allocation2 + $0x9]]
    %v92 = vstv %s91
    %v93 = vmul.f32 %v92, %v55
    %v94 = vadd.f32 %v90, %v93
    %s95 = sld [smem:[#allocation2 + $0x32]]
    %v96 = vstv %s95
    %v97 = vadd.f32 %v94, %v96
    %v98 = vmax.f32 %v97, 0.0
    %s99 = sld [smem:[#allocation2 + $0xa]]
    %v100 = vstv %s99
    %v101 = vmul.f32 %v100, %v37
    %s102 = sld [smem:[#allocation2 + $0xb]]
    %v103 = vstv %s102
    %v104 = vmul.f32 %v103, %v39
    %v105 = vadd.f32 %v101, %v104
    %s106 = sld [smem:[#allocation2 + $0xc]]
    %v107 = vstv %s106
    %v108 = vmul.f32 %v107, %v41
    %v109 = vadd.f32 %v105, %v108
    %s110 = sld [smem:[#allocation2 + $0xd]]
    %v111 = vstv %s110
    %v112 = vmul.f32 %v111, %v43
    %v113 = vadd.f32 %v109, %v112
    %s114 = sld [smem:[#allocation2 + $0xe]]
    %v115 = vstv %s114
    %v116 = vmul.f32 %v115, %v45
    %v117 = vadd.f32 %v113, %v116
    %s118 = sld [smem:[#allocation2 + $0xf]]
    %v119 = vstv %s118
    %v120 = vmul.f32 %v119, %v47
    %v121 = vadd.f32 %v117, %v120
    %s122 = sld [smem:[#allocation2 + $0x10]]
    %v123 = vstv %s122
    %v124 = vmul.f32 %v123, %v49
    %v125 = vadd.f32 %v121, %v124
    %s126 = sld [smem:[#allocation2 + $0x11]]
    %v127 = vstv %s126
    %v128 = vmul.f32 %v127, %v51
    %v129 = vadd.f32 %v125, %v128
    %s130 = sld [smem:[#allocation2 + $0x12]]
    %v131 = vstv %s130
    %v132 = vmul.f32 %v131, %v53
    %v133 = vadd.f32 %v129, %v132
    %s134 = sld [smem:[#allocation2 + $0x13]]
    %v135 = vstv %s134
    %v136 = vmul.f32 %v135, %v55
    %v137 = vadd.f32 %v133, %v136
    %s138 = sld [smem:[#allocation2 + $0x33]]
    %v139 = vstv %s138
    %v140 = vadd.f32 %v137, %v139
    %v141 = vmax.f32 %v140, 0.0
    %s142 = sld [smem:[#allocation2 + $0x14]]
    %v143 = vstv %s142
    %v144 = vmul.f32 %v143, %v37
    %s145 = sld [smem:[#allocation2 + $0x15]]
    %v146 = vstv %s145
    %v147 = vmul.f32 %v146, %v39
    %v148 = vadd.f32 %v144, %v147
    %s149 = sld [smem:[#allocation2 + $0x16]]
    %v150 = vstv %s149
    %v151 = vmul.f32 %v150, %v41
    %v152 = vadd.f32 %v148, %v151
    %s153 = sld [smem:[#allocation2 + $0x17]]
    %v154 = vstv %s153
    %v155 = vmul.f32 %v154, %v43
    %v156 = vadd.f32 %v152, %v155
    %s157 = sld [smem:[#allocation2 + $0x18]]
    %v158 = vstv %s157
    %v159 = vmul.f32 %v158, %v45
    %v160 = vadd.f32 %v156, %v159
    %s161 = sld [smem:[#allocation2 + $0x19]]
    %v162 = vstv %s161
    %v163 = vmul.f32 %v162, %v47
    %v164 = vadd.f32 %v160, %v163
    %s165 = sld [smem:[#allocation2 + $0x1a]]
    %v166 = vstv %s165
    %v167 = vmul.f32 %v166, %v49
    %v168 = vadd.f32 %v164, %v167
    %s169 = sld [smem:[#allocation2 + $0x1b]]
    %v170 = vstv %s169
    %v171 = vmul.f32 %v170, %v51
    %v172 = vadd.f32 %v168, %v171
    %s173 = sld [smem:[#allocation2 + $0x1c]]
    %v174 = vstv %s173
    %v175 = vmul.f32 %v174, %v53
    %v176 = vadd.f32 %v172, %v175
    %s177 = sld [smem:[#allocation2 + $0x1d]]
    %v178 = vstv %s177
    %v179 = vmul.f32 %v178, %v55
    %v180 = vadd.f32 %v176, %v179
    %s181 = sld [smem:[#allocation2 + $0x34]]
    %v182 = vstv %s181
    %v183 = vadd.f32 %v180, %v182
    %v184 = vmax.f32 %v183, 0.0
    %s185 = sld [smem:[#allocation2 + $0x1e]]
    %v186 = vstv %s185
    %v187 = vmul.f32 %v186, %v37
    %s188 = sld [smem:[#allocation2 + $0x1f]]
    %v189 = vstv %s188
    %v190 = vmul.f32 %v189, %v39
    %v191 = vadd.f32 %v187, %v190
    %s192 = sld [smem:[#allocation2 + $0x20]]
    %v193 = vstv %s192
    %v194 = vmul.f32 %v193, %v41
    %v195 = vadd.f32 %v191, %v194
    %s196 = sld [smem:[#allocation2 + $0x21]]
    %v197 = vstv %s196
    %v198 = vmul.f32 %v197, %v43
    %v199 = vadd.f32 %v195, %v198
    %s200 = sld [smem:[#allocation2 + $0x22]]
    %v201 = vstv %s200
    %v202 = vmul.f32 %v201, %v45
    %v203 = vadd.f32 %v199, %v202
    %s204 = sld [smem:[#allocation2 + $0x23]]
    %v205 = vstv %s204
    %v206 = vmul.f32 %v205, %v47
    %v207 = vadd.f32 %v203, %v206
    %s208 = sld [smem:[#allocation2 + $0x24]]
    %v209 = vstv %s208
    %v210 = vmul.f32 %v209, %v49
    %v211 = vadd.f32 %v207, %v210
    %s212 = sld [smem:[#allocation2 + $0x25]]
    %v213 = vstv %s212
    %v214 = vmul.f32 %v213, %v51
    %v215 = vadd.f32 %v211, %v214
    %s216 = sld [smem:[#allocation2 + $0x26]]
    %v217 = vstv %s216
    %v218 = vmul.f32 %v217, %v53
    %v219 = vadd.f32 %v215, %v218
    %s220 = sld [smem:[#allocation2 + $0x27]]
    %v221 = vstv %s220
    %v222 = vmul.f32 %v221, %v55
    %v223 = vadd.f32 %v219, %v222
    %s224 = sld [smem:[#allocation2 + $0x35]]
    %v225 = vstv %s224
    %v226 = vadd.f32 %v223, %v225
    %v227 = vmax.f32 %v226, 0.0
    %s228 = sld [smem:[#allocation2 + $0x28]]
    %v229 = vstv %s228
    %v230 = vmul.f32 %v229, %v37
    %s231 = sld [smem:[#allocation2 + $0x29]]
    %v232 = vstv %s231
    %v233 = vmul.f32 %v232, %v39
    %v234 = vadd.f32 %v230, %v233
    %s235 = sld [smem:[#allocation2 + $0x2a]]
    %v236 = vstv %s235
    %v237 = vmul.f32 %v236, %v41
    %v238 = vadd.f32 %v234, %v237
    %s239 = sld [smem:[#allocation2 + $0x2b]]
    %v240 = vstv %s239
    %v241 = vmul.f32 %v240, %v43
    %v242 = vadd.f32 %v238, %v241
    %s243 = sld [smem:[#allocation2 + $0x2c]]
    %v244 = vstv %s243
    %v245 = vmul.f32 %v244, %v45
    %v246 = vadd.f32 %v242, %v245
    %s247 = sld [smem:[#allocation2 + $0x2d]]
    %v248 = vstv %s247
    %v249 = vmul.f32 %v248, %v47
    %v250 = vadd.f32 %v246, %v249
    %s251 = sld [smem:[#allocation2 + $0x2e]]
    %v252 = vstv %s251
    %v253 = vmul.f32 %v252, %v49
    %v254 = vadd.f32 %v250, %v253
    %s255 = sld [smem:[#allocation2 + $0x2f]]
    %v256 = vstv %s255
    %v257 = vmul.f32 %v256, %v51
    %v258 = vadd.f32 %v254, %v257
    %s259 = sld [smem:[#allocation2 + $0x30]]
    %v260 = vstv %s259
    %v261 = vmul.f32 %v260, %v53
    %v262 = vadd.f32 %v258, %v261
    %s263 = sld [smem:[#allocation2 + $0x31]]
    %v264 = vstv %s263
    %v265 = vmul.f32 %v264, %v55
    %v266 = vadd.f32 %v262, %v265
    %s267 = sld [smem:[#allocation2 + $0x36]]
    %v268 = vstv %s267
    %v269 = vadd.f32 %v266, %v268
    %v270 = vmax.f32 %v269, 0.0
    %s271 = sld [smem:[#allocation2 + $0x37]]
    %v272 = vstv %s271
    %v273 = vmul.f32 %v272, %v98
    %s274 = sld [smem:[#allocation2 + $0x38]]
    %v275 = vstv %s274
    %v276 = vmul.f32 %v275, %v141
    %v277 = vadd.f32 %v273, %v276
    %s278 = sld [smem:[#allocation2 + $0x39]]
    %v279 = vstv %s278
    %v280 = vmul.f32 %v279, %v184
    %v281 = vadd.f32 %v277, %v280
    %s282 = sld [smem:[#allocation2 + $0x3a]]
    %v283 = vstv %s282
    %v284 = vmul.f32 %v283, %v227
    %v285 = vadd.f32 %v281, %v284
    %s286 = sld [smem:[#allocation2 + $0x3b]]
    %v287 = vstv %s286
    %v288 = vmul.f32 %v287, %v270
    %v289 = vadd.f32 %v285, %v288
    %s290 = sld [smem:[#allocation2 + $0x50]]
    %v291 = vstv %s290
    %v292 = vadd.f32 %v289, %v291
    %v293 = vmax.f32 %v292, 0.0
    %s294 = sld [smem:[#allocation2 + $0x3c]]
    %v295 = vstv %s294
    %v296 = vmul.f32 %v295, %v98
    %s297 = sld [smem:[#allocation2 + $0x3d]]
    %v298 = vstv %s297
    %v299 = vmul.f32 %v298, %v141
    %v300 = vadd.f32 %v296, %v299
    %s301 = sld [smem:[#allocation2 + $0x3e]]
    %v302 = vstv %s301
    %v303 = vmul.f32 %v302, %v184
    %v304 = vadd.f32 %v300, %v303
    %s305 = sld [smem:[#allocation2 + $0x3f]]
    %v306 = vstv %s305
    %v307 = vmul.f32 %v306, %v227
    %v308 = vadd.f32 %v304, %v307
    %s309 = sld [smem:[#allocation2 + $0x40]]
    %v310 = vstv %s309
    %v311 = vmul.f32 %v310, %v270
    %v312 = vadd.f32 %v308, %v311
    %s313 = sld [smem:[#allocation2 + $0x51]]
    %v314 = vstv %s313
    %v315 = vadd.f32 %v312, %v314
    %v316 = vmax.f32 %v315, 0.0
    %s317 = sld [smem:[#allocation2 + $0x41]]
    %v318 = vstv %s317
    %v319 = vmul.f32 %v318, %v98
    %s320 = sld [smem:[#allocation2 + $0x42]]
    %v321 = vstv %s320
    %v322 = vmul.f32 %v321, %v141
    %v323 = vadd.f32 %v319, %v322
    %s324 = sld [smem:[#allocation2 + $0x43]]
    %v325 = vstv %s324
    %v326 = vmul.f32 %v325, %v184
    %v327 = vadd.f32 %v323, %v326
    %s328 = sld [smem:[#allocation2 + $0x44]]
    %v329 = vstv %s328
    %v330 = vmul.f32 %v329, %v227
    %v331 = vadd.f32 %v327, %v330
    %s332 = sld [smem:[#allocation2 + $0x45]]
    %v333 = vstv %s332
    %v334 = vmul.f32 %v333, %v270
    %v335 = vadd.f32 %v331, %v334
    %s336 = sld [smem:[#allocation2 + $0x52]]
    %v337 = vstv %s336
    %v338 = vadd.f32 %v335, %v337
    %v339 = vmax.f32 %v338, 0.0
    %s340 = sld [smem:[#allocation2 + $0x46]]
    %v341 = vstv %s340
    %v342 = vmul.f32 %v341, %v98
    %s343 = sld [smem:[#allocation2 + $0x47]]
    %v344 = vstv %s343
    %v345 = vmul.f32 %v344, %v141
    %v346 = vadd.f32 %v342, %v345
    %s347 = sld [smem:[#allocation2 + $0x48]]
    %v348 = vstv %s347
    %v349 = vmul.f32 %v348, %v184
    %v350 = vadd.f32 %v346, %v349
    %s351 = sld [smem:[#allocation2 + $0x49]]
    %v352 = vstv %s351
    %v353 = vmul.f32 %v352, %v227
    %v354 = vadd.f32 %v350, %v353
    %s355 = sld [smem:[#allocation2 + $0x4a]]
    %v356 = vstv %s355
    %v357 = vmul.f32 %v356, %v270
    %v358 = vadd.f32 %v354, %v357
    %s359 = sld [smem:[#allocation2 + $0x53]]
    %v360 = vstv %s359
    %v361 = vadd.f32 %v358, %v360
    %v362 = vmax.f32 %v361, 0.0
    %s363 = sld [smem:[#allocation2 + $0x4b]]
    %v364 = vstv %s363
    %v365 = vmul.f32 %v364, %v98
    %s366 = sld [smem:[#allocation2 + $0x4c]]
    %v367 = vstv %s366
    %v368 = vmul.f32 %v367, %v141
    %v369 = vadd.f32 %v365, %v368
    %s370 = sld [smem:[#allocation2 + $0x4d]]
    %v371 = vstv %s370
    %v372 = vmul.f32 %v371, %v184
    %v373 = vadd.f32 %v369, %v372
    %s374 = sld [smem:[#allocation2 + $0x4e]]
    %v375 = vstv %s374
    %v376 = vmul.f32 %v375, %v227
    %v377 = vadd.f32 %v373, %v376
    %s378 = sld [smem:[#allocation2 + $0x4f]]
    %v379 = vstv %s378
    %v380 = vmul.f32 %v379, %v270
    %v381 = vadd.f32 %v377, %v380
    %s382 = sld [smem:[#allocation2 + $0x54]]
    %v383 = vstv %s382
    %v384 = vadd.f32 %v381, %v383
    %v385 = vmax.f32 %v384, 0.0
    %s386 = sld [smem:[#allocation2 + $0x55]]
    %v387 = vstv %s386
    %v388 = vmul.f32 %v387, %v293
    %s389 = sld [smem:[#allocation2 + $0x56]]
    %v390 = vstv %s389
    %v391 = vmul.f32 %v390, %v316
    %v392 = vadd.f32 %v388, %v391
    %s393 = sld [smem:[#allocation2 + $0x57]]
    %v394 = vstv %s393
    %v395 = vmul.f32 %v394, %v339
    %v396 = vadd.f32 %v392, %v395
    %s397 = sld [smem:[#allocation2 + $0x58]]
    %v398 = vstv %s397
    %v399 = vmul.f32 %v398, %v362
    %v400 = vadd.f32 %v396, %v399
    %s401 = sld [smem:[#allocation2 + $0x59]]
    %v402 = vstv %s401
    %v403 = vmul.f32 %v402, %v385
    %v404 = vadd.f32 %v400, %v403
    %s405 = sld [smem:[#allocation2 + $0x5a]]
    %v406 = vstv %s405
    %v407 = vadd.f32 %v404, %v406
    %v408 = vsub.f32 0.0, %v407
    %v409 = vmul.f32 %v408, 1.442695
    %v410 = vpow.pop %v409
    %v411 = vadd.f32 %v410, 1.0
    %v412 = vrcp.pop %v411
    %v413 = vmul.f32 %v412, 2.0
    %414 = vst [vmem:[#allocation7] sm:$0xff] %v413
    // Predicated region
    $region18: #{tpu_custom_call.1} parent=1 // pred_check
      _
    $region19: #{tpu_custom_call.1} parent=1 // pred_check_branch
      %416 = sbr.rel (0) target = $region21
    $region20: #{tpu_custom_call.1} parent=1 // pred_region
      %s418 = ssub.s32 128, 128
      %419 = vsyncadd [#allocation4], %s418
      %s421 = sshll.u32 [#allocation7], 4
      %s422 = int_to_ptr.vmem [resolvable:$true] %s421
      %424 = dma.vmem_to_hbm [thread:$0]  %s422, 128, %s2, [#allocation4]
    $region21: #{tpu_custom_call.1} parent=1 // pred_fallthru
      _
    // Predicated region
    $region22: #{tpu_custom_call.1} parent=1 // pred_check
      _
    $region23: #{tpu_custom_call.1} parent=1 // pred_check_branch
      %426 = sbr.rel (0) target = $region25
    $region24: #{tpu_custom_call.1} parent=1 // pred_region
      %427 = dma.done [#allocation4], 128
    $region25: #{tpu_custom_call.1} parent=1 // pred_fallthru
      _
    %428 = vsyncpa [#allocation3], 1
    %429 = vsyncpa [#allocation4], 1
    %430 = vsyncpa [#allocation5], 1

</llo_original>
